<compile_context>
chip_gen: v7x
topology: tpu7x:2x2x1
jax: 0.10.0
libtpu: 0.0.40
codegen_flags: <defaults>
</compile_context>

<pallas_src>
import numpy as np
import jax
import jax.numpy as jnp
from jax.experimental import pallas as pl
from jax.experimental.pallas import tpu as pltpu


# ---------------- Gaussian window + band (Toeplitz) matrices (compile-time constants) ----------
def gaussian_1d(window_size: int, sigma: float) -> np.ndarray:
    xs = np.arange(window_size, dtype=np.float64)
    g = np.exp(-((xs - window_size // 2) ** 2) / (2.0 * sigma ** 2))
    return g / g.sum()


def band_matrix(n: int, g: np.ndarray, pad: int) -> np.ndarray:
    """M such that (M @ x)[i] = sum_k g[k] * x_zero_padded[i + k]  (padding folded in)."""
    K = g.shape[0]
    M = np.zeros((n, n), dtype=np.float64)
    for i in range(n):
        for k in range(K):
            j = i + k - pad
            if 0 <= j < n:
                M[i, j] += g[k]
    return M


# ---------------- Pallas kernel factory ----------------
def make_ssim_loss(b: int, c: int, h: int, w: int,
                   window_size: int = 11, sigma: float = 1.5, max_val: float = 1.0):
    pad = (window_size - 1) // 2
    C1 = (0.01 * max_val) ** 2
    C2 = (0.03 * max_val) ** 2
    cw = c * w
    n_elems = float(b * c * h * w)

    g = gaussian_1d(window_size, sigma)
    k2d = np.outer(g, g).astype(np.float32)                     # for the reference only
    gv_np = band_matrix(h, g, pad).astype(np.float32)           # (h, h)   vertical pass (left-mul)
    gh_np = band_matrix(w, g, pad).T.astype(np.float32)         # (w, w)   horizontal pass (right-mul)
    gh_bd_np = np.kron(np.eye(c, dtype=np.float32), gh_np)      # (c*w, c*w) block-diag over channels

    def ssim_kernel(x1_ref, x2_ref, gv_ref, gh_ref, out_ref):
        # x1_ref / x2_ref : (1, h, c*w) image tile (channels folded into the lane dim)
        # gv_ref          : (h, h)      vertical Gaussian band matrix
        # gh_ref          : (c*w, c*w)  horizontal Gaussian band matrix (channel block-diag)
        # out_ref         : (1, 8, 128) per-grid-step partial loss sum (scalar broadcast)
        p1 = x1_ref[0]
        p2 = x2_ref[0]
        gv = gv_ref[...]
        gh = gh_ref[...]

        # Vertical (H) Gaussian pass on the 5 moment maps (MXU), stack along sublanes,
        # then a single wide horizontal (W) pass (MXU).
        def vpass(q):
            return jnp.dot(gv, q, preferred_element_type=jnp.float32)

        stacked = jnp.concatenate(
            [vpass(p1), vpass(p2), vpass(p1 * p1), vpass(p2 * p2), vpass(p1 * p2)],
            axis=0)                                                      # (5h, c*w)
        filt = jnp.dot(stacked, gh, preferred_element_type=jnp.float32)  # (5h, c*w)

        mu1 = filt[0 * h:1 * h]
        mu2 = filt[1 * h:2 * h]
        e11 = filt[2 * h:3 * h]
        e22 = filt[3 * h:4 * h]
        e12 = filt[4 * h:5 * h]

        mu1_sq = mu1 * mu1
        mu2_sq = mu2 * mu2
        mu1_mu2 = mu1 * mu2
        sigma1_sq = e11 - mu1_sq
        sigma2_sq = e22 - mu2_sq
        sigma12 = e12 - mu1_mu2

        num = (2.0 * mu1_mu2 + C1) * (2.0 * sigma12 + C2)
        den = (mu1_sq + mu2_sq + C1) * (sigma1_sq + sigma2_sq + C2)
        ssim_map = num * pl.reciprocal(den, approx=False)   # divide on the EUP path
        loss = jnp.clip(1.0 - ssim_map, 0.0, 1.0) * 0.5     # matches torch.clamp(...)/2

        # Store-light epilogue: only a scalar partial sum leaves the kernel per grid step.
        out_ref[0] = jnp.full((8, 128), jnp.sum(loss), dtype=jnp.float32)

    pallas_fn = pl.pallas_call(
        ssim_kernel,
        out_shape=jax.ShapeDtypeStruct((b, 8, 128), jnp.float32),
        grid=(b,),
        in_specs=[
            pl.BlockSpec((1, h, cw), lambda i: (i, 0, 0)),
            pl.BlockSpec((1, h, cw), lambda i: (i, 0, 0)),
            pl.BlockSpec((h, h), lambda i: (0, 0)),
            pl.BlockSpec((cw, cw), lambda i: (0, 0)),
        ],
        out_specs=pl.BlockSpec((1, 8, 128), lambda i: (i, 0, 0)),
        compiler_params=pltpu.CompilerParams(
            dimension_semantics=("parallel",)),
    )

    gv_j = jnp.asarray(gv_np)
    gh_j = jnp.asarray(gh_bd_np)

    @jax.jit
    def ssim_loss(img1, img2):
        img1 = img1.astype(jnp.float32)
        img2 = img2.astype(jnp.float32)
        # (b, c, h, w) -> (b, h, c*w): lane-dense layout, channels folded into lanes.
        x1 = jnp.transpose(img1, (0, 2, 1, 3)).reshape(b, h, cw)
        x2 = jnp.transpose(img2, (0, 2, 1, 3)).reshape(b, h, cw)
        partial = pallas_fn(x1, x2, gv_j, gh_j)          # (b, 8, 128): scalar broadcast per step
        return jnp.sum(partial[:, 0, 0]) / n_elems       # reduction='mean'

    return ssim_loss, k2d, pad, C1, C2


# ---------------- pure-JAX reference (for sanity check) ----------------
def ref_ssim_loss(img1, img2, k2d, pad, C1, C2):
    b, c, h, w = img1.shape
    k = jnp.asarray(k2d)[None, None]                 # (1,1,K,K)
    kc = jnp.tile(k, (c, 1, 1, 1))                   # (C,1,K,K) depthwise

    def f2d(x):
        return jax.lax.conv_general_dilated(
            x, kc, window_strides=(1, 1),
            padding=[(pad, pad), (pad, pad)],
            dimension_numbers=('NCHW', 'OIHW', 'NCHW'),
            feature_group_count=c)

    mu1, mu2 = f2d(img1), f2d(img2)
    mu1_sq, mu2_sq, mu1_mu2 = mu1 ** 2, mu2 ** 2, mu1 * mu2
    sigma1_sq = f2d(img1 * img1) - mu1_sq
    sigma2_sq = f2d(img2 * img2) - mu2_sq
    sigma12 = f2d(img1 * img2) - mu1_mu2
    ssim_map = (2 * mu1_mu2 + C1) * (2 * sigma12 + C2) / (
        (mu1_sq + mu2_sq + C1) * (sigma1_sq + sigma2_sq + C2))
    return jnp.mean(jnp.clip(1.0 - ssim_map, 0.0, 1.0) / 2.0)


if __name__ == "__main__":
    B, C, H, W = 2, 4, 16, 16
    key = jax.random.PRNGKey(0)
    k1, k2 = jax.random.split(key)
    img1 = jax.random.uniform(k1, (B, C, H, W), dtype=jnp.float32)
    img2 = jax.random.uniform(k2, (B, C, H, W), dtype=jnp.float32)

    ssim_loss, k2d, pad, C1, C2 = make_ssim_loss(B, C, H, W, window_size=11,
                                                 sigma=1.5, max_val=1.0)

    out = ssim_loss(img1, img2)
    jax.block_until_ready(out)

    ref = ref_ssim_loss(img1, img2, k2d, pad, C1, C2)
    np.testing.assert_allclose(np.asarray(out), np.asarray(ref), rtol=5e-4, atol=1e-5)

    print("KERNEL_OK")
</pallas_src>

<mosaic_0001>
module attributes {stable_mosaic.version = 11 : i64} {
  func.func @ssim_kernel(%arg0: i32, %arg1: memref<1x16x64xf32, #tpu.memory_space<vmem>>, %arg2: memref<1x16x64xf32, #tpu.memory_space<vmem>>, %arg3: memref<16x16xf32, #tpu.memory_space<vmem>>, %arg4: memref<64x64xf32, #tpu.memory_space<vmem>>, %arg5: memref<1x8x128xf32, #tpu.memory_space<vmem>>) attributes {dimension_semantics = [#tpu.dimension_semantics<parallel>], iteration_bounds = array<i64: 2>, scalar_prefetch = 0 : i64, scratch_operands = 0 : i64, tpu.core_type = #tpu.core_type<tc>, window_params = [{transform_indices = @transform_0, window_bounds = array<i64: 1, 16, 64>}, {transform_indices = @transform_1, window_bounds = array<i64: 1, 16, 64>}, {pipeline_mode = #tpu.pipeline_mode<synchronous>, transform_indices = @transform_2, window_bounds = array<i64: 16, 16>}, {pipeline_mode = #tpu.pipeline_mode<synchronous>, transform_indices = @transform_3, window_bounds = array<i64: 64, 64>}, {transform_indices = @transform_4, window_bounds = array<i64: 1, 8, 128>}]} {
    %c0 = arith.constant 0 : index
    %c0_0 = arith.constant 0 : index
    %c0_1 = arith.constant 0 : index
    %0 = vector.load %arg1[%c0, %c0_0, %c0_1] : memref<1x16x64xf32, #tpu.memory_space<vmem>>, vector<1x16x64xf32>
    %1 = vector.shape_cast %0 : vector<1x16x64xf32> to vector<16x64xf32>
    %c0_2 = arith.constant 0 : index
    %c0_3 = arith.constant 0 : index
    %c0_4 = arith.constant 0 : index
    %2 = vector.load %arg2[%c0_2, %c0_3, %c0_4] : memref<1x16x64xf32, #tpu.memory_space<vmem>>, vector<1x16x64xf32>
    %3 = vector.shape_cast %2 : vector<1x16x64xf32> to vector<16x64xf32>
    %c0_5 = arith.constant 0 : index
    %c0_6 = arith.constant 0 : index
    %4 = vector.load %arg3[%c0_5, %c0_6] : memref<16x16xf32, #tpu.memory_space<vmem>>, vector<16x16xf32>
    %c0_7 = arith.constant 0 : index
    %c0_8 = arith.constant 0 : index
    %5 = vector.load %arg4[%c0_7, %c0_8] : memref<64x64xf32, #tpu.memory_space<vmem>>, vector<64x64xf32>
    %cst = arith.constant dense<0.000000e+00> : vector<16x64xf32>
    %6 = tpu.matmul %4, %1, %cst {dimension_numbers = #tpu.dot_dimension_numbers<[1], [0], [0], [1], [0, 0, 1, 1], [], []>} : vector<16x16xf32>, vector<16x64xf32>, vector<16x64xf32> -> vector<16x64xf32>
    %cst_9 = arith.constant dense<0.000000e+00> : vector<16x64xf32>
    %7 = tpu.matmul %4, %3, %cst_9 {dimension_numbers = #tpu.dot_dimension_numbers<[1], [0], [0], [1], [0, 0, 1, 1], [], []>} : vector<16x16xf32>, vector<16x64xf32>, vector<16x64xf32> -> vector<16x64xf32>
    %8 = arith.mulf %1, %1 : vector<16x64xf32>
    %cst_10 = arith.constant dense<0.000000e+00> : vector<16x64xf32>
    %9 = tpu.matmul %4, %8, %cst_10 {dimension_numbers = #tpu.dot_dimension_numbers<[1], [0], [0], [1], [0, 0, 1, 1], [], []>} : vector<16x16xf32>, vector<16x64xf32>, vector<16x64xf32> -> vector<16x64xf32>
    %10 = arith.mulf %3, %3 : vector<16x64xf32>
    %cst_11 = arith.constant dense<0.000000e+00> : vector<16x64xf32>
    %11 = tpu.matmul %4, %10, %cst_11 {dimension_numbers = #tpu.dot_dimension_numbers<[1], [0], [0], [1], [0, 0, 1, 1], [], []>} : vector<16x16xf32>, vector<16x64xf32>, vector<16x64xf32> -> vector<16x64xf32>
    %12 = arith.mulf %1, %3 : vector<16x64xf32>
    %cst_12 = arith.constant dense<0.000000e+00> : vector<16x64xf32>
    %13 = tpu.matmul %4, %12, %cst_12 {dimension_numbers = #tpu.dot_dimension_numbers<[1], [0], [0], [1], [0, 0, 1, 1], [], []>} : vector<16x16xf32>, vector<16x64xf32>, vector<16x64xf32> -> vector<16x64xf32>
    %14 = tpu.concatenate %6, %7, %9, %11, %13 in 0 : vector<16x64xf32>, vector<16x64xf32>, vector<16x64xf32>, vector<16x64xf32>, vector<16x64xf32> -> vector<80x64xf32>
    %cst_13 = arith.constant dense<0.000000e+00> : vector<80x64xf32>
    %15 = tpu.matmul %14, %5, %cst_13 {dimension_numbers = #tpu.dot_dimension_numbers<[1], [0], [0], [1], [0, 0, 1, 1], [], []>} : vector<80x64xf32>, vector<64x64xf32>, vector<80x64xf32> -> vector<80x64xf32>
    %16 = vector.extract_strided_slice %15 {offsets = [0, 0], sizes = [16, 64], strides = [1, 1]} : vector<80x64xf32> to vector<16x64xf32>
    %17 = vector.extract_strided_slice %15 {offsets = [16, 0], sizes = [16, 64], strides = [1, 1]} : vector<80x64xf32> to vector<16x64xf32>
    %18 = vector.extract_strided_slice %15 {offsets = [32, 0], sizes = [16, 64], strides = [1, 1]} : vector<80x64xf32> to vector<16x64xf32>
    %19 = vector.extract_strided_slice %15 {offsets = [48, 0], sizes = [16, 64], strides = [1, 1]} : vector<80x64xf32> to vector<16x64xf32>
    %20 = vector.extract_strided_slice %15 {offsets = [64, 0], sizes = [16, 64], strides = [1, 1]} : vector<80x64xf32> to vector<16x64xf32>
    %21 = arith.mulf %16, %16 : vector<16x64xf32>
    %22 = arith.mulf %17, %17 : vector<16x64xf32>
    %23 = arith.mulf %16, %17 : vector<16x64xf32>
    %24 = arith.subf %18, %21 : vector<16x64xf32>
    %25 = arith.subf %19, %22 : vector<16x64xf32>
    %26 = arith.subf %20, %23 : vector<16x64xf32>
    %cst_14 = arith.constant 2.000000e+00 : f32
    %27 = vector.broadcast %cst_14 : f32 to vector<16x64xf32>
    %28 = arith.mulf %27, %23 : vector<16x64xf32>
    %cst_15 = arith.constant 9.99999974E-5 : f32
    %29 = vector.broadcast %cst_15 : f32 to vector<16x64xf32>
    %30 = arith.addf %28, %29 : vector<16x64xf32>
    %cst_16 = arith.constant 2.000000e+00 : f32
    %31 = vector.broadcast %cst_16 : f32 to vector<16x64xf32>
    %32 = arith.mulf %31, %26 : vector<16x64xf32>
    %cst_17 = arith.constant 8.99999984E-4 : f32
    %33 = vector.broadcast %cst_17 : f32 to vector<16x64xf32>
    %34 = arith.addf %32, %33 : vector<16x64xf32>
    %35 = arith.mulf %30, %34 : vector<16x64xf32>
    %36 = arith.addf %21, %22 : vector<16x64xf32>
    %cst_18 = arith.constant 9.99999974E-5 : f32
    %37 = vector.broadcast %cst_18 : f32 to vector<16x64xf32>
    %38 = arith.addf %36, %37 : vector<16x64xf32>
    %39 = arith.addf %24, %25 : vector<16x64xf32>
    %cst_19 = arith.constant 8.99999984E-4 : f32
    %40 = vector.broadcast %cst_19 : f32 to vector<16x64xf32>
    %41 = arith.addf %39, %40 : vector<16x64xf32>
    %42 = arith.mulf %38, %41 : vector<16x64xf32>
    %43 = tpu.reciprocal %42 : vector<16x64xf32> -> vector<16x64xf32>
    %44 = arith.mulf %35, %43 : vector<16x64xf32>
    %cst_20 = arith.constant 1.000000e+00 : f32
    %45 = vector.broadcast %cst_20 : f32 to vector<16x64xf32>
    %46 = arith.subf %45, %44 : vector<16x64xf32>
    %cst_21 = arith.constant 0.000000e+00 : f32
    %cst_22 = arith.constant 1.000000e+00 : f32
    %47 = vector.broadcast %cst_21 : f32 to vector<16x64xf32>
    %48 = arith.maximumf %47, %46 : vector<16x64xf32>
    %49 = vector.broadcast %cst_22 : f32 to vector<16x64xf32>
    %50 = arith.minimumf %49, %48 : vector<16x64xf32>
    %cst_23 = arith.constant 5.000000e-01 : f32
    %51 = vector.broadcast %cst_23 : f32 to vector<16x64xf32>
    %52 = arith.mulf %50, %51 : vector<16x64xf32>
    %53 = vector.shape_cast %52 : vector<16x64xf32> to vector<1x16x64xf32>
    %cst_24 = arith.constant dense<0.000000e+00> : vector<1xf32>
    %54 = vector.multi_reduction <add>, %53, %cst_24 [1, 2] : vector<1x16x64xf32> to vector<1xf32>
    %55 = vector.shape_cast %54 : vector<1xf32> to vector<1x1x1xf32>
    %56 = vector.extract %55[0, 0, 0] : f32 from vector<1x1x1xf32>
    %57 = vector.broadcast %56 : f32 to vector<8x128xf32>
    %c0_25 = arith.constant 0 : index
    %c0_26 = arith.constant 0 : index
    %c0_27 = arith.constant 0 : index
    %58 = vector.load %arg5[%c0_25, %c0_26, %c0_27] : memref<1x8x128xf32, #tpu.memory_space<vmem>>, vector<1x8x128xf32>
    %59 = vector.shape_cast %58 : vector<1x8x128xf32> to vector<8x128xf32>
    %60 = vector.shape_cast %57 : vector<8x128xf32> to vector<1x8x128xf32>
    tpu.vector_store %arg5[%c0_25, %c0_26, %c0_27], %60 {strides = array<i32>} : memref<1x8x128xf32, #tpu.memory_space<vmem>>, vector<1x8x128xf32>,
    return
  }
  func.func @transform_0(%arg0: i32) -> (i32, i32, i32) {
    %c0_i32 = arith.constant 0 : i32
    %c0_i32_0 = arith.constant 0 : i32
    %c0_i32_1 = arith.constant 0 : i32
    return %arg0, %c0_i32, %c0_i32_0 : i32, i32, i32
  }
  func.func @transform_1(%arg0: i32) -> (i32, i32, i32) {
    %c0_i32 = arith.constant 0 : i32
    %c0_i32_0 = arith.constant 0 : i32
    %c0_i32_1 = arith.constant 0 : i32
    return %arg0, %c0_i32, %c0_i32_0 : i32, i32, i32
  }
  func.func @transform_2(%arg0: i32) -> (i32, i32) {
    %c0_i32 = arith.constant 0 : i32
    %c0_i32_0 = arith.constant 0 : i32
    %c0_i32_1 = arith.constant 0 : i32
    return %c0_i32, %c0_i32_0 : i32, i32
  }
  func.func @transform_3(%arg0: i32) -> (i32, i32) {
    %c0_i32 = arith.constant 0 : i32
    %c0_i32_0 = arith.constant 0 : i32
    %c0_i32_1 = arith.constant 0 : i32
    return %c0_i32, %c0_i32_0 : i32, i32
  }
  func.func @transform_4(%arg0: i32) -> (i32, i32, i32) {
    %c0_i32 = arith.constant 0 : i32
    %c0_i32_0 = arith.constant 0 : i32
    %c0_i32_1 = arith.constant 0 : i32
    return %arg0, %c0_i32, %c0_i32_0 : i32, i32, i32
  }
}

</mosaic_0001>

<llo_original>
// kernel: ssim_loss.1
$region0: #{ssim_loss.1}
  #allocation0 [shape = 'u32[]', space=smem, size = 0x4, offset = 0x4, fixed_abs, tag = 'smem constant byte address 0x4 - core index']
  #allocation1 [shape = 'u32[144,128]{1,0:T(1,128)}', space=vmem, size = 0x12000, scoped, tag = 'internal scratch']
  %s0 = inlined_call_operand.vmem [shape: f32[2,16,64], index: 0, kind: input, shape index: {}]
  %s1 = inlined_call_operand.vmem [shape: f32[2,16,64], index: 1, kind: input, shape index: {}]
  %s2 = inlined_call_operand.vmem [shape: f32[16,16], index: 2, kind: input, shape index: {}]
  %s3 = inlined_call_operand.vmem [shape: f32[64,64], index: 3, kind: input, shape index: {}]
  %s4 = inlined_call_operand.vmem [shape: f32[2,8,128], index: 4, kind: output, shape index: {}]
  %s5 = sld [smem:[#allocation0]]
  $region49: #{ssim_loss.1} parent=0
    _
  %s7 = ssub.s32 1, %s5
  %s8 = scalar_select 0, %s7, %s5
  loop: start=0, step=1, limit=4
  $region2: #{ssim_loss.1} parent=0 // loop_pre_header
    _
  $region3: #{ssim_loss.1} parent=0 // loop_header
    %s10 = sphi 0, %s14
    %p11 = scmp.ge.s32.totalorder %s10, 4
    %s20 = sphi 0, %s22
    %s23 = sphi 0, %s20
    %s24 = sphi 0, %s23
    %s40 = sphi 0, %s24
    %s46 = sphi 0, %s48
    %s49 = sphi 0, %s46
    %s50 = sphi 0, %s49
    %s66 = sphi 0, %s50
    %s70 = sphi 0, %s70
    %s72 = sphi 0, %s70
    %s73 = sphi 0, %s72
    %s87 = sphi 0, %s73
    %s91 = sphi 0, %s91
    %s93 = sphi 0, %s91
    %s94 = sphi 0, %s93
    %s108 = sphi 0, %s94
    %s114 = sphi 0, %s116
    %s117 = sphi 0, %s114
    %s118 = sphi 0, %s117
    %s134 = sphi 0, %s118
  $region4: #{ssim_loss.1} parent=0 // loop_header_branch
    %13 = sbr.rel (%p11) target = $region8
  $region5: #{ssim_loss.1} parent=0 // loop_body
    %s15 = ssub.s32 %s10, 1
    %s16 = ssub.s32 %s10, 2
    %s17 = sadd.s32 %s10, 1
    %s18 = ssub.s32 %s10, %s17
    %p19 = scmp.eq.s32.totalorder %s18, 0
    %s21 = sadd.s32 %s20, 1
    %s22 = scalar_select %p19, %s20, %s21
    %p25 = pneg %p19
    %p26 = scmp.eq.s32.totalorder %s10, 1
    %p27 = por %p25, %p26
    %p28 = scmp.ne.s32.totalorder %s20, %s23
    %p29 = scmp.eq.s32.totalorder %s10, 0
    %p30 = por %p28, %p29
    %p31 = scmp.ne.s32.totalorder %s20, %s23
    %p32 = scmp.eq.s32.totalorder %s15, 1
    %p33 = por %p31, %p32
    %p34 = scmp.ne.s32.totalorder %s23, %s24
    %p35 = scmp.eq.s32.totalorder %s15, 0
    %p36 = por %p34, %p35
    %p37 = scmp.ne.s32.totalorder %s23, %s24
    %p38 = scmp.eq.s32.totalorder %s16, 1
    %p39 = por %p37, %p38
    %p41 = scmp.ne.s32.totalorder %s24, %s40
    %p42 = scmp.eq.s32.totalorder %s16, 0
    %p43 = por %p41, %p42
    %s44 = ssub.s32 %s10, %s17
    %p45 = scmp.eq.s32.totalorder %s44, 0
    %s47 = sadd.s32 %s46, 1
    %s48 = scalar_select %p45, %s46, %s47
    %p51 = pneg %p45
    %p52 = scmp.eq.s32.totalorder %s10, 1
    %p53 = por %p51, %p52
    %p54 = scmp.ne.s32.totalorder %s46, %s49
    %p55 = scmp.eq.s32.totalorder %s10, 0
    %p56 = por %p54, %p55
    %p57 = scmp.ne.s32.totalorder %s46, %s49
    %p58 = scmp.eq.s32.totalorder %s15, 1
    %p59 = por %p57, %p58
    %p60 = scmp.ne.s32.totalorder %s49, %s50
    %p61 = scmp.eq.s32.totalorder %s15, 0
    %p62 = por %p60, %p61
    %p63 = scmp.ne.s32.totalorder %s49, %s50
    %p64 = scmp.eq.s32.totalorder %s16, 1
    %p65 = por %p63, %p64
    %p67 = scmp.ne.s32.totalorder %s50, %s66
    %p68 = scmp.eq.s32.totalorder %s16, 0
    %p69 = por %p67, %p68
    %s71 = sadd.s32 %s70, 1
    %p74 = scmp.eq.s32.totalorder %s10, 1
    %p75 = scmp.ne.s32.totalorder %s70, %s72
    %p76 = scmp.eq.s32.totalorder %s10, 0
    %p77 = por %p75, %p76
    %p78 = scmp.ne.s32.totalorder %s70, %s72
    %p79 = scmp.eq.s32.totalorder %s15, 1
    %p80 = por %p78, %p79
    %p81 = scmp.ne.s32.totalorder %s72, %s73
    %p82 = scmp.eq.s32.totalorder %s15, 0
    %p83 = por %p81, %p82
    %p84 = scmp.ne.s32.totalorder %s72, %s73
    %p85 = scmp.eq.s32.totalorder %s16, 1
    %p86 = por %p84, %p85
    %p88 = scmp.ne.s32.totalorder %s73, %s87
    %p89 = scmp.eq.s32.totalorder %s16, 0
    %p90 = por %p88, %p89
    %s92 = sadd.s32 %s91, 1
    %p95 = scmp.eq.s32.totalorder %s10, 1
    %p96 = scmp.ne.s32.totalorder %s91, %s93
    %p97 = scmp.eq.s32.totalorder %s10, 0
    %p98 = por %p96, %p97
    %p99 = scmp.ne.s32.totalorder %s91, %s93
    %p100 = scmp.eq.s32.totalorder %s15, 1
    %p101 = por %p99, %p100
    %p102 = scmp.ne.s32.totalorder %s93, %s94
    %p103 = scmp.eq.s32.totalorder %s15, 0
    %p104 = por %p102, %p103
    %p105 = scmp.ne.s32.totalorder %s93, %s94
    %p106 = scmp.eq.s32.totalorder %s16, 1
    %p107 = por %p105, %p106
    %p109 = scmp.ne.s32.totalorder %s94, %s108
    %p110 = scmp.eq.s32.totalorder %s16, 0
    %p111 = por %p109, %p110
    %s112 = ssub.s32 %s10, %s17
    %p113 = scmp.eq.s32.totalorder %s112, 0
    %s115 = sadd.s32 %s114, 1
    %s116 = scalar_select %p113, %s114, %s115
    %p119 = pneg %p113
    %p120 = scmp.eq.s32.totalorder %s10, 1
    %p121 = por %p119, %p120
    %p122 = scmp.ne.s32.totalorder %s114, %s117
    %p123 = scmp.eq.s32.totalorder %s10, 0
    %p124 = por %p122, %p123
    %p125 = scmp.ne.s32.totalorder %s114, %s117
    %p126 = scmp.eq.s32.totalorder %s15, 1
    %p127 = por %p125, %p126
    %p128 = scmp.ne.s32.totalorder %s117, %s118
    %p129 = scmp.eq.s32.totalorder %s15, 0
    %p130 = por %p128, %p129
    %p131 = scmp.ne.s32.totalorder %s117, %s118
    %p132 = scmp.eq.s32.totalorder %s16, 1
    %p133 = por %p131, %p132
    %p135 = scmp.ne.s32.totalorder %s118, %s134
    %p136 = scmp.eq.s32.totalorder %s16, 0
    %p137 = por %p135, %p136
    %p138 = scmp.le.s32.totalorder 1, %s10
    %p139 = scmp.lt.s32.totalorder %s10, 3
    %p140 = pnand %p138, %p139
    %p141 = pneg %p140
    // Predicated region
    $region9: #{ssim_loss.1} parent=5 // pred_check
      _
    $region10: #{ssim_loss.1} parent=5 // pred_check_branch
      %143 = sbr.rel (%p140) target = $region12
    $region11: #{ssim_loss.1} parent=5 // pred_region
      %s144 = ssub.s32 %s10, 1
      // Predicated region
      $region13: #{ssim_loss.1} parent=11 // pred_check
        %p145 = pneg %p83
      $region14: #{ssim_loss.1} parent=11 // pred_check_branch
        %147 = sbr.rel (%p145) target = $region16
      $region15: #{ssim_loss.1} parent=11 // pred_region
        _
      $region16: #{ssim_loss.1} parent=11 // pred_fallthru
        _
      // Predicated region
      $region17: #{ssim_loss.1} parent=11 // pred_check
        %p148 = pneg %p104
      $region18: #{ssim_loss.1} parent=11 // pred_check_branch
        %150 = sbr.rel (%p148) target = $region20
      $region19: #{ssim_loss.1} parent=11 // pred_region
        _
      $region20: #{ssim_loss.1} parent=11 // pred_fallthru
        _
    $region12: #{ssim_loss.1} parent=5 // pred_fallthru
      _
    %p151 = scmp.lt.s32.totalorder %s10, 2
    // Predicated region
    $region21: #{ssim_loss.1} parent=5 // pred_check
      %p152 = pneg %p151
    $region22: #{ssim_loss.1} parent=5 // pred_check_branch
      %154 = sbr.rel (%p152) target = $region24
    $region23: #{ssim_loss.1} parent=5 // pred_region
      // Predicated region
      $region25: #{ssim_loss.1} parent=23 // pred_check
        %p155 = pneg %p30
      $region26: #{ssim_loss.1} parent=23 // pred_check_branch
        %157 = sbr.rel (%p155) target = $region28
      $region27: #{ssim_loss.1} parent=23 // pred_region
        %p158 = scmp.lt.s32.totalorder %s10, 1
        %s159 = scalar_select %p158, %s10, 1
        %s160 = smul.addr %s159, 2
        %s161 = smul.addr %s160, 8
        %s162 = scalar_lea.vmem %s0, %s161
      $region28: #{ssim_loss.1} parent=23 // pred_fallthru
        _
      // Predicated region
      $region29: #{ssim_loss.1} parent=23 // pred_check
        %p163 = pneg %p56
      $region30: #{ssim_loss.1} parent=23 // pred_check_branch
        %165 = sbr.rel (%p163) target = $region32
      $region31: #{ssim_loss.1} parent=23 // pred_region
        %p166 = scmp.lt.s32.totalorder %s10, 1
        %s167 = scalar_select %p166, %s10, 1
        %s168 = smul.addr %s167, 2
        %s169 = smul.addr %s168, 8
        %s170 = scalar_lea.vmem %s1, %s169
      $region32: #{ssim_loss.1} parent=23 // pred_fallthru
        _
    $region24: #{ssim_loss.1} parent=5 // pred_fallthru
      _
    %p171 = scmp.le.s32.totalorder 1, %s10
    %p172 = scmp.lt.s32.totalorder %s10, 3
    %p173 = pnand %p171, %p172
    %p174 = pneg %p173
    // Predicated region
    $region33: #{ssim_loss.1} parent=5 // pred_check
      _
    $region34: #{ssim_loss.1} parent=5 // pred_check_branch
      %176 = sbr.rel (%p173) target = $region36
    $region35: #{ssim_loss.1} parent=5 // pred_region
      %s177 = ssub.s32 %s10, 1
      %p178 = scmp.lt.s32.totalorder %s15, 1
      %s179 = scalar_select %p178, %s15, 1
      %s180 = smul.addr %s179, 2
      %s181 = smul.addr %s180, 8
      %s182 = scalar_lea.vmem %s0, %s181
      %p183 = pneg %p36
      %p184 = pneg %p33
      %p185 = scmp.lt.s32.totalorder %s15, 1
      %s186 = scalar_select %p185, %s15, 1
      %s187 = smul.addr %s186, 2
      %s188 = smul.addr %s187, 8
      %s189 = scalar_lea.vmem %s1, %s188
      %p190 = pneg %p62
      %p191 = pneg %p59
      %p192 = pneg %p83
      %p193 = pneg %p80
      %p194 = pneg %p104
      %p195 = pneg %p101
      %p196 = pneg %p130
      %p197 = pneg %p127
      %p198 = scmp.lt.s32.totalorder %s15, 1
      %s199 = scalar_select %p198, %s15, 1
      %s200 = smul.addr %s199, 8
      %s201 = scalar_lea.vmem %s4, %s200
      %p202 = scmp.lt.s32.totalorder %s15, 1
      %s203 = scalar_select %p202, %s15, 1
      %s204 = smul.addr %s203, 2
      %s205 = smul.addr %s204, 8
      %s206 = scalar_lea.vmem %s0, %s205
      %p207 = scmp.lt.s32.totalorder %s15, 1
      %s208 = scalar_select %p207, %s15, 1
      %s209 = smul.addr %s208, 2
      %s210 = smul.addr %s209, 8
      %s211 = scalar_lea.vmem %s1, %s210
      %p212 = scmp.lt.s32.totalorder %s15, 1
      %s213 = scalar_select %p212, %s15, 1
      %s214 = smul.addr %s213, 8
      %s215 = scalar_lea.vmem %s4, %s214
      %v216 = vld [vmem:[%s206] sm:$0xff]
      %v217 = vld [vmem:[%s206 + $0x8] sm:$0xff]
      %v218 = vld [vmem:[%s211] sm:$0xff]
      %v219 = vld [vmem:[%s211 + $0x8] sm:$0xff]
      %v220 = vld [vmem:[%s2] sm:$0xff]
      %v221 = vld [vmem:[%s2 + $0x8] sm:$0xff]
      %v222 = vld [vmem:[%s3] sm:$0xff]
      %v223 = vld [vmem:[%s3 + $0x8] sm:$0xff]
      %v224 = vld [vmem:[%s3 + $0x10] sm:$0xff]
      %v225 = vld [vmem:[%s3 + $0x18] sm:$0xff]
      %v226 = vld [vmem:[%s3 + $0x20] sm:$0xff]
      %v227 = vld [vmem:[%s3 + $0x28] sm:$0xff]
      %v228 = vld [vmem:[%s3 + $0x30] sm:$0xff]
      %v229 = vld [vmem:[%s3 + $0x38] sm:$0xff]
      %vm230 = vcmask 130048
      %v232 = vsel %vm230, %v220, 0
      %v235 = vsel %vm230, %v221, 0
      %237 = vmatprep.subr.mxu0 0.0
      %238 = vmatpush1.msra.mxu0 %v216
      %239 = vmatprep.subr.mxu0 0.0
      %240 = vmatpush1.msra.mxu0 %v217
      %241 = vmatprep.subr.mxu0 0.0
      %242 = vmatpush1.msra.mxu0 0.0
      %243 = vmatprep.subr.mxu0 0.0
      %244 = vmatpush1.msra.mxu0 0.0
      %245 = vmatprep.subr.mxu0 0.0
      %246 = vmatpush1.msra.mxu0 0.0
      %247 = vmatprep.subr.mxu0 0.0
      %248 = vmatpush1.msra.mxu0 0.0
      %249 = vmatprep.subr.mxu0 0.0
      %250 = vmatpush1.msra.mxu0 0.0
      %251 = vmatprep.subr.mxu0 0.0
      %252 = vmatpush1.msra.mxu0 0.0
      %253 = vmatprep.subr.mxu0 0.0
      %254 = vmatpush1.msra.mxu0 0.0
      %255 = vmatprep.subr.mxu0 0.0
      %256 = vmatpush1.msra.mxu0 0.0
      %257 = vmatprep.subr.mxu0 0.0
      %258 = vmatpush1.msra.mxu0 0.0
      %259 = vmatprep.subr.mxu0 0.0
      %260 = vmatpush1.msra.mxu0 0.0
      %261 = vmatprep.subr.mxu0 0.0
      %262 = vmatpush1.msra.mxu0 0.0
      %263 = vmatprep.subr.mxu0 0.0
      %264 = vmatpush1.msra.mxu0 0.0
      %265 = vmatprep.subr.mxu0 0.0
      %266 = vmatpush1.msra.mxu0 0.0
      %267 = vmatprep.subr.mxu0 0.0
      %268 = vmatpush1.msra.mxu0 0.0
      %269 = vmatprep.subr.mxu0 0.0
      %270 = vmatpush1.msra.mxu0 0.0
      %271 = vmatprep.subr.mxu0 0.0
      %272 = vmatpush1.msra.mxu0 0.0
      %273 = vmatprep.subr.mxu0 0.0
      %274 = vmatpush1.msra.mxu0 0.0
      %275 = vmatprep.subr.mxu0 0.0
      %276 = vmatpush1.msra.mxu0 0.0
      %277 = vmatprep.subr.mxu0 0.0
      %278 = vmatpush1.msra.mxu0 0.0
      %279 = vmatprep.subr.mxu0 0.0
      %280 = vmatpush1.msra.mxu0 0.0
      %281 = vmatprep.subr.mxu0 0.0
      %282 = vmatpush1.msra.mxu0 0.0
      %283 = vmatprep.subr.mxu0 0.0
      %284 = vmatpush1.msra.mxu0 0.0
      %285 = vmatprep.subr.mxu0 0.0
      %286 = vmatpush1.msra.mxu0 0.0
      %287 = vmatprep.subr.mxu0 0.0
      %288 = vmatpush1.msra.mxu0 0.0
      %289 = vmatprep.subr.mxu0 0.0
      %290 = vmatpush1.msra.mxu0 0.0
      %291 = vmatprep.subr.mxu0 0.0
      %292 = vmatpush1.msra.mxu0 0.0
      %293 = vmatprep.subr.mxu0 0.0
      %294 = vmatpush1.msra.mxu0 0.0
      %295 = vmatprep.subr.mxu0 0.0
      %296 = vmatpush1.msra.mxu0 0.0
      %297 = vmatprep.subr.mxu0 0.0
      %298 = vmatpush1.msra.mxu0 0.0
      %299 = vmatprep.subr.mxu0 0.0
      %300 = vmatpush1.msra.mxu0 0.0
      %301 = vmatprep.mubr.f32.mxu0 0.0
      %302 = vmatmul.mubr.f32.gmra.mrb[0].mxu0 %v232
      %v303 = vpop.f32.mrb[0].mxu0
      %v304 = vadd.f32 0.0, %v303
      %v305 = vpop.f32.mrb[0].mxu0
      %306 = vmatprep.mubr.f32.mxu0 0.0
      %307 = vmatmul.mubr.f32.gmra.mrb[0].mxu0 %v235
      %v308 = vpop.f32.mrb[0].mxu0
      %v309 = vadd.f32 0.0, %v308
      %v310 = vpop.f32.mrb[0].mxu0
      %311 = vdwg.mxu0
      %312 = vmatprep.subr.mxu0 0.0
      %313 = vmatpush1.msra.mxu0 %v218
      %314 = vmatprep.subr.mxu0 0.0
      %315 = vmatpush1.msra.mxu0 %v219
      %316 = vmatprep.subr.mxu0 0.0
      %317 = vmatpush1.msra.mxu0 0.0
      %318 = vmatprep.subr.mxu0 0.0
      %319 = vmatpush1.msra.mxu0 0.0
      %320 = vmatprep.subr.mxu0 0.0
      %321 = vmatpush1.msra.mxu0 0.0
      %322 = vmatprep.subr.mxu0 0.0
      %323 = vmatpush1.msra.mxu0 0.0
      %324 = vmatprep.subr.mxu0 0.0
      %325 = vmatpush1.msra.mxu0 0.0
      %326 = vmatprep.subr.mxu0 0.0
      %327 = vmatpush1.msra.mxu0 0.0
      %328 = vmatprep.subr.mxu0 0.0
      %329 = vmatpush1.msra.mxu0 0.0
      %330 = vmatprep.subr.mxu0 0.0
      %331 = vmatpush1.msra.mxu0 0.0
      %332 = vmatprep.subr.mxu0 0.0
      %333 = vmatpush1.msra.mxu0 0.0
      %334 = vmatprep.subr.mxu0 0.0
      %335 = vmatpush1.msra.mxu0 0.0
      %336 = vmatprep.subr.mxu0 0.0
      %337 = vmatpush1.msra.mxu0 0.0
      %338 = vmatprep.subr.mxu0 0.0
      %339 = vmatpush1.msra.mxu0 0.0
      %340 = vmatprep.subr.mxu0 0.0
      %341 = vmatpush1.msra.mxu0 0.0
      %342 = vmatprep.subr.mxu0 0.0
      %343 = vmatpush1.msra.mxu0 0.0
      %344 = vmatprep.subr.mxu0 0.0
      %345 = vmatpush1.msra.mxu0 0.0
      %346 = vmatprep.subr.mxu0 0.0
      %347 = vmatpush1.msra.mxu0 0.0
      %348 = vmatprep.subr.mxu0 0.0
      %349 = vmatpush1.msra.mxu0 0.0
      %350 = vmatprep.subr.mxu0 0.0
      %351 = vmatpush1.msra.mxu0 0.0
      %352 = vmatprep.subr.mxu0 0.0
      %353 = vmatpush1.msra.mxu0 0.0
      %354 = vmatprep.subr.mxu0 0.0
      %355 = vmatpush1.msra.mxu0 0.0
      %356 = vmatprep.subr.mxu0 0.0
      %357 = vmatpush1.msra.mxu0 0.0
      %358 = vmatprep.subr.mxu0 0.0
      %359 = vmatpush1.msra.mxu0 0.0
      %360 = vmatprep.subr.mxu0 0.0
      %361 = vmatpush1.msra.mxu0 0.0
      %362 = vmatprep.subr.mxu0 0.0
      %363 = vmatpush1.msra.mxu0 0.0
      %364 = vmatprep.subr.mxu0 0.0
      %365 = vmatpush1.msra.mxu0 0.0
      %366 = vmatprep.subr.mxu0 0.0
      %367 = vmatpush1.msra.mxu0 0.0
      %368 = vmatprep.subr.mxu0 0.0
      %369 = vmatpush1.msra.mxu0 0.0
      %370 = vmatprep.subr.mxu0 0.0
      %371 = vmatpush1.msra.mxu0 0.0
      %372 = vmatprep.subr.mxu0 0.0
      %373 = vmatpush1.msra.mxu0 0.0
      %374 = vmatprep.subr.mxu0 0.0
      %375 = vmatpush1.msra.mxu0 0.0
      %376 = vmatprep.mubr.f32.mxu0 0.0
      %377 = vmatmul.mubr.f32.gmra.mrb[0].mxu0 %v232
      %v378 = vpop.f32.mrb[0].mxu0
      %v379 = vadd.f32 0.0, %v378
      %v380 = vpop.f32.mrb[0].mxu0
      %381 = vmatprep.mubr.f32.mxu0 0.0
      %382 = vmatmul.mubr.f32.gmra.mrb[0].mxu0 %v235
      %v383 = vpop.f32.mrb[0].mxu0
      %v384 = vadd.f32 0.0, %v383
      %v385 = vpop.f32.mrb[0].mxu0
      %386 = vdwg.mxu0
      %v387 = vmul.f32 %v216, %v216
      %v388 = vmul.f32 %v217, %v217
      %389 = vmatprep.subr.mxu0 0.0
      %390 = vmatpush1.msra.mxu0 %v387
      %391 = vmatprep.subr.mxu0 0.0
      %392 = vmatpush1.msra.mxu0 %v388
      %393 = vmatprep.subr.mxu0 0.0
      %394 = vmatpush1.msra.mxu0 0.0
      %395 = vmatprep.subr.mxu0 0.0
      %396 = vmatpush1.msra.mxu0 0.0
      %397 = vmatprep.subr.mxu0 0.0
      %398 = vmatpush1.msra.mxu0 0.0
      %399 = vmatprep.subr.mxu0 0.0
      %400 = vmatpush1.msra.mxu0 0.0
      %401 = vmatprep.subr.mxu0 0.0
      %402 = vmatpush1.msra.mxu0 0.0
      %403 = vmatprep.subr.mxu0 0.0
      %404 = vmatpush1.msra.mxu0 0.0
      %405 = vmatprep.subr.mxu0 0.0
      %406 = vmatpush1.msra.mxu0 0.0
      %407 = vmatprep.subr.mxu0 0.0
      %408 = vmatpush1.msra.mxu0 0.0
      %409 = vmatprep.subr.mxu0 0.0
      %410 = vmatpush1.msra.mxu0 0.0
      %411 = vmatprep.subr.mxu0 0.0
      %412 = vmatpush1.msra.mxu0 0.0
      %413 = vmatprep.subr.mxu0 0.0
      %414 = vmatpush1.msra.mxu0 0.0
      %415 = vmatprep.subr.mxu0 0.0
      %416 = vmatpush1.msra.mxu0 0.0
      %417 = vmatprep.subr.mxu0 0.0
      %418 = vmatpush1.msra.mxu0 0.0
      %419 = vmatprep.subr.mxu0 0.0
      %420 = vmatpush1.msra.mxu0 0.0
      %421 = vmatprep.subr.mxu0 0.0
      %422 = vmatpush1.msra.mxu0 0.0
      %423 = vmatprep.subr.mxu0 0.0
      %424 = vmatpush1.msra.mxu0 0.0
      %425 = vmatprep.subr.mxu0 0.0
      %426 = vmatpush1.msra.mxu0 0.0
      %427 = vmatprep.subr.mxu0 0.0
      %428 = vmatpush1.msra.mxu0 0.0
      %429 = vmatprep.subr.mxu0 0.0
      %430 = vmatpush1.msra.mxu0 0.0
      %431 = vmatprep.subr.mxu0 0.0
      %432 = vmatpush1.msra.mxu0 0.0
      %433 = vmatprep.subr.mxu0 0.0
      %434 = vmatpush1.msra.mxu0 0.0
      %435 = vmatprep.subr.mxu0 0.0
      %436 = vmatpush1.msra.mxu0 0.0
      %437 = vmatprep.subr.mxu0 0.0
      %438 = vmatpush1.msra.mxu0 0.0
      %439 = vmatprep.subr.mxu0 0.0
      %440 = vmatpush1.msra.mxu0 0.0
      %441 = vmatprep.subr.mxu0 0.0
      %442 = vmatpush1.msra.mxu0 0.0
      %443 = vmatprep.subr.mxu0 0.0
      %444 = vmatpush1.msra.mxu0 0.0
      %445 = vmatprep.subr.mxu0 0.0
      %446 = vmatpush1.msra.mxu0 0.0
      %447 = vmatprep.subr.mxu0 0.0
      %448 = vmatpush1.msra.mxu0 0.0
      %449 = vmatprep.subr.mxu0 0.0
      %450 = vmatpush1.msra.mxu0 0.0
      %451 = vmatprep.subr.mxu0 0.0
      %452 = vmatpush1.msra.mxu0 0.0
      %453 = vmatprep.mubr.f32.mxu0 0.0
      %454 = vmatmul.mubr.f32.gmra.mrb[0].mxu0 %v232
      %v455 = vpop.f32.mrb[0].mxu0
      %v456 = vadd.f32 0.0, %v455
      %v457 = vpop.f32.mrb[0].mxu0
      %458 = vmatprep.mubr.f32.mxu0 0.0
      %459 = vmatmul.mubr.f32.gmra.mrb[0].mxu0 %v235
      %v460 = vpop.f32.mrb[0].mxu0
      %v461 = vadd.f32 0.0, %v460
      %v462 = vpop.f32.mrb[0].mxu0
      %463 = vdwg.mxu0
      %v464 = vmul.f32 %v218, %v218
      %v465 = vmul.f32 %v219, %v219
      %466 = vmatprep.subr.mxu0 0.0
      %467 = vmatpush1.msra.mxu0 %v464
      %468 = vmatprep.subr.mxu0 0.0
      %469 = vmatpush1.msra.mxu0 %v465
      %470 = vmatprep.subr.mxu0 0.0
      %471 = vmatpush1.msra.mxu0 0.0
      %472 = vmatprep.subr.mxu0 0.0
      %473 = vmatpush1.msra.mxu0 0.0
      %474 = vmatprep.subr.mxu0 0.0
      %475 = vmatpush1.msra.mxu0 0.0
      %476 = vmatprep.subr.mxu0 0.0
      %477 = vmatpush1.msra.mxu0 0.0
      %478 = vmatprep.subr.mxu0 0.0
      %479 = vmatpush1.msra.mxu0 0.0
      %480 = vmatprep.subr.mxu0 0.0
      %481 = vmatpush1.msra.mxu0 0.0
      %482 = vmatprep.subr.mxu0 0.0
      %483 = vmatpush1.msra.mxu0 0.0
      %484 = vmatprep.subr.mxu0 0.0
      %485 = vmatpush1.msra.mxu0 0.0
      %486 = vmatprep.subr.mxu0 0.0
      %487 = vmatpush1.msra.mxu0 0.0
      %488 = vmatprep.subr.mxu0 0.0
      %489 = vmatpush1.msra.mxu0 0.0
      %490 = vmatprep.subr.mxu0 0.0
      %491 = vmatpush1.msra.mxu0 0.0
      %492 = vmatprep.subr.mxu0 0.0
      %493 = vmatpush1.msra.mxu0 0.0
      %494 = vmatprep.subr.mxu0 0.0
      %495 = vmatpush1.msra.mxu0 0.0
      %496 = vmatprep.subr.mxu0 0.0
      %497 = vmatpush1.msra.mxu0 0.0
      %498 = vmatprep.subr.mxu0 0.0
      %499 = vmatpush1.msra.mxu0 0.0
      %500 = vmatprep.subr.mxu0 0.0
      %501 = vmatpush1.msra.mxu0 0.0
      %502 = vmatprep.subr.mxu0 0.0
      %503 = vmatpush1.msra.mxu0 0.0
      %504 = vmatprep.subr.mxu0 0.0
      %505 = vmatpush1.msra.mxu0 0.0
      %506 = vmatprep.subr.mxu0 0.0
      %507 = vmatpush1.msra.mxu0 0.0
      %508 = vmatprep.subr.mxu0 0.0
      %509 = vmatpush1.msra.mxu0 0.0
      %510 = vmatprep.subr.mxu0 0.0
      %511 = vmatpush1.msra.mxu0 0.0
      %512 = vmatprep.subr.mxu0 0.0
      %513 = vmatpush1.msra.mxu0 0.0
      %514 = vmatprep.subr.mxu0 0.0
      %515 = vmatpush1.msra.mxu0 0.0
      %516 = vmatprep.subr.mxu0 0.0
      %517 = vmatpush1.msra.mxu0 0.0
      %518 = vmatprep.subr.mxu0 0.0
      %519 = vmatpush1.msra.mxu0 0.0
      %520 = vmatprep.subr.mxu0 0.0
      %521 = vmatpush1.msra.mxu0 0.0
      %522 = vmatprep.subr.mxu0 0.0
      %523 = vmatpush1.msra.mxu0 0.0
      %524 = vmatprep.subr.mxu0 0.0
      %525 = vmatpush1.msra.mxu0 0.0
      %526 = vmatprep.subr.mxu0 0.0
      %527 = vmatpush1.msra.mxu0 0.0
      %528 = vmatprep.subr.mxu0 0.0
      %529 = vmatpush1.msra.mxu0 0.0
      %530 = vmatprep.mubr.f32.mxu0 0.0
      %531 = vmatmul.mubr.f32.gmra.mrb[0].mxu0 %v232
      %v532 = vpop.f32.mrb[0].mxu0
      %v533 = vadd.f32 0.0, %v532
      %v534 = vpop.f32.mrb[0].mxu0
      %535 = vmatprep.mubr.f32.mxu0 0.0
      %536 = vmatmul.mubr.f32.gmra.mrb[0].mxu0 %v235
      %v537 = vpop.f32.mrb[0].mxu0
      %v538 = vadd.f32 0.0, %v537
      %v539 = vpop.f32.mrb[0].mxu0
      %540 = vdwg.mxu0
      %v541 = vmul.f32 %v216, %v218
      %v542 = vmul.f32 %v217, %v219
      %543 = vmatprep.subr.mxu0 0.0
      %544 = vmatpush1.msra.mxu0 %v541
      %545 = vmatprep.subr.mxu0 0.0
      %546 = vmatpush1.msra.mxu0 %v542
      %547 = vmatprep.subr.mxu0 0.0
      %548 = vmatpush1.msra.mxu0 0.0
      %549 = vmatprep.subr.mxu0 0.0
      %550 = vmatpush1.msra.mxu0 0.0
      %551 = vmatprep.subr.mxu0 0.0
      %552 = vmatpush1.msra.mxu0 0.0
      %553 = vmatprep.subr.mxu0 0.0
      %554 = vmatpush1.msra.mxu0 0.0
      %555 = vmatprep.subr.mxu0 0.0
      %556 = vmatpush1.msra.mxu0 0.0
      %557 = vmatprep.subr.mxu0 0.0
      %558 = vmatpush1.msra.mxu0 0.0
      %559 = vmatprep.subr.mxu0 0.0
      %560 = vmatpush1.msra.mxu0 0.0
      %561 = vmatprep.subr.mxu0 0.0
      %562 = vmatpush1.msra.mxu0 0.0
      %563 = vmatprep.subr.mxu0 0.0
      %564 = vmatpush1.msra.mxu0 0.0
      %565 = vmatprep.subr.mxu0 0.0
      %566 = vmatpush1.msra.mxu0 0.0
      %567 = vmatprep.subr.mxu0 0.0
      %568 = vmatpush1.msra.mxu0 0.0
      %569 = vmatprep.subr.mxu0 0.0
      %570 = vmatpush1.msra.mxu0 0.0
      %571 = vmatprep.subr.mxu0 0.0
      %572 = vmatpush1.msra.mxu0 0.0
      %573 = vmatprep.subr.mxu0 0.0
      %574 = vmatpush1.msra.mxu0 0.0
      %575 = vmatprep.subr.mxu0 0.0
      %576 = vmatpush1.msra.mxu0 0.0
      %577 = vmatprep.subr.mxu0 0.0
      %578 = vmatpush1.msra.mxu0 0.0
      %579 = vmatprep.subr.mxu0 0.0
      %580 = vmatpush1.msra.mxu0 0.0
      %581 = vmatprep.subr.mxu0 0.0
      %582 = vmatpush1.msra.mxu0 0.0
      %583 = vmatprep.subr.mxu0 0.0
      %584 = vmatpush1.msra.mxu0 0.0
      %585 = vmatprep.subr.mxu0 0.0
      %586 = vmatpush1.msra.mxu0 0.0
      %587 = vmatprep.subr.mxu0 0.0
      %588 = vmatpush1.msra.mxu0 0.0
      %589 = vmatprep.subr.mxu0 0.0
      %590 = vmatpush1.msra.mxu0 0.0
      %591 = vmatprep.subr.mxu0 0.0
      %592 = vmatpush1.msra.mxu0 0.0
      %593 = vmatprep.subr.mxu0 0.0
      %594 = vmatpush1.msra.mxu0 0.0
      %595 = vmatprep.subr.mxu0 0.0
      %596 = vmatpush1.msra.mxu0 0.0
      %597 = vmatprep.subr.mxu0 0.0
      %598 = vmatpush1.msra.mxu0 0.0
      %599 = vmatprep.subr.mxu0 0.0
      %600 = vmatpush1.msra.mxu0 0.0
      %601 = vmatprep.subr.mxu0 0.0
      %602 = vmatpush1.msra.mxu0 0.0
      %603 = vmatprep.subr.mxu0 0.0
      %604 = vmatpush1.msra.mxu0 0.0
      %605 = vmatprep.subr.mxu0 0.0
      %606 = vmatpush1.msra.mxu0 0.0
      %607 = vmatprep.mubr.f32.mxu0 0.0
      %608 = vmatmul.mubr.f32.gmra.mrb[0].mxu0 %v232
      %v609 = vpop.f32.mrb[0].mxu0
      %v610 = vadd.f32 0.0, %v609
      %v611 = vpop.f32.mrb[0].mxu0
      %612 = vmatprep.mubr.f32.mxu0 0.0
      %613 = vmatmul.mubr.f32.gmra.mrb[0].mxu0 %v235
      %v614 = vpop.f32.mrb[0].mxu0
      %v615 = vadd.f32 0.0, %v614
      %v616 = vpop.f32.mrb[0].mxu0
      %617 = vdwg.mxu0
      %vm618 = vcmask 523264
      %v620 = vsel %vm618, %v304, 0
      %v623 = vsel %vm618, %v309, 0
      %v626 = vsel %vm618, %v379, 0
      %v629 = vsel %vm618, %v384, 0
      %v632 = vsel %vm618, %v456, 0
      %v635 = vsel %vm618, %v461, 0
      %v638 = vsel %vm618, %v533, 0
      %v641 = vsel %vm618, %v538, 0
      %v644 = vsel %vm618, %v610, 0
      %v647 = vsel %vm618, %v615, 0
      %649 = vmatprep.subr.mxu0 0.0
      %650 = vmatpush1.msra.mxu0 %v222
      %651 = vmatprep.subr.mxu0 0.0
      %652 = vmatpush1.msra.mxu0 %v223
      %653 = vmatprep.subr.mxu0 0.0
      %654 = vmatpush1.msra.mxu0 %v224
      %655 = vmatprep.subr.mxu0 0.0
      %656 = vmatpush1.msra.mxu0 %v225
      %657 = vmatprep.subr.mxu0 0.0
      %658 = vmatpush1.msra.mxu0 %v226
      %659 = vmatprep.subr.mxu0 0.0
      %660 = vmatpush1.msra.mxu0 %v227
      %661 = vmatprep.subr.mxu0 0.0
      %662 = vmatpush1.msra.mxu0 %v228
      %663 = vmatprep.subr.mxu0 0.0
      %664 = vmatpush1.msra.mxu0 %v229
      %665 = vmatprep.subr.mxu0 0.0
      %666 = vmatpush1.msra.mxu0 0.0
      %667 = vmatprep.subr.mxu0 0.0
      %668 = vmatpush1.msra.mxu0 0.0
      %669 = vmatprep.subr.mxu0 0.0
      %670 = vmatpush1.msra.mxu0 0.0
      %671 = vmatprep.subr.mxu0 0.0
      %672 = vmatpush1.msra.mxu0 0.0
      %673 = vmatprep.subr.mxu0 0.0
      %674 = vmatpush1.msra.mxu0 0.0
      %675 = vmatprep.subr.mxu0 0.0
      %676 = vmatpush1.msra.mxu0 0.0
      %677 = vmatprep.subr.mxu0 0.0
      %678 = vmatpush1.msra.mxu0 0.0
      %679 = vmatprep.subr.mxu0 0.0
      %680 = vmatpush1.msra.mxu0 0.0
      %681 = vmatprep.subr.mxu0 0.0
      %682 = vmatpush1.msra.mxu0 0.0
      %683 = vmatprep.subr.mxu0 0.0
      %684 = vmatpush1.msra.mxu0 0.0
      %685 = vmatprep.subr.mxu0 0.0
      %686 = vmatpush1.msra.mxu0 0.0
      %687 = vmatprep.subr.mxu0 0.0
      %688 = vmatpush1.msra.mxu0 0.0
      %689 = vmatprep.subr.mxu0 0.0
      %690 = vmatpush1.msra.mxu0 0.0
      %691 = vmatprep.subr.mxu0 0.0
      %692 = vmatpush1.msra.mxu0 0.0
      %693 = vmatprep.subr.mxu0 0.0
      %694 = vmatpush1.msra.mxu0 0.0
      %695 = vmatprep.subr.mxu0 0.0
      %696 = vmatpush1.msra.mxu0 0.0
      %697 = vmatprep.subr.mxu0 0.0
      %698 = vmatpush1.msra.mxu0 0.0
      %699 = vmatprep.subr.mxu0 0.0
      %700 = vmatpush1.msra.mxu0 0.0
      %701 = vmatprep.subr.mxu0 0.0
      %702 = vmatpush1.msra.mxu0 0.0
      %703 = vmatprep.subr.mxu0 0.0
      %704 = vmatpush1.msra.mxu0 0.0
      %705 = vmatprep.subr.mxu0 0.0
      %706 = vmatpush1.msra.mxu0 0.0
      %707 = vmatprep.subr.mxu0 0.0
      %708 = vmatpush1.msra.mxu0 0.0
      %709 = vmatprep.subr.mxu0 0.0
      %710 = vmatpush1.msra.mxu0 0.0
      %711 = vmatprep.subr.mxu0 0.0
      %712 = vmatpush1.msra.mxu0 0.0
      %713 = vmatprep.mubr.f32.mxu0 0.0
      %714 = vmatmul.mubr.f32.gmra.mrb[0].mxu0 %v620
      %v715 = vpop.f32.mrb[0].mxu0
      %v716 = vadd.f32 0.0, %v715
      %v717 = vpop.f32.mrb[0].mxu0
      %718 = vmatprep.mubr.f32.mxu0 0.0
      %719 = vmatmul.mubr.f32.gmra.mrb[0].mxu0 %v623
      %v720 = vpop.f32.mrb[0].mxu0
      %v721 = vadd.f32 0.0, %v720
      %v722 = vpop.f32.mrb[0].mxu0
      %723 = vmatprep.mubr.f32.mxu0 0.0
      %724 = vmatmul.mubr.f32.gmra.mrb[0].mxu0 %v626
      %v725 = vpop.f32.mrb[0].mxu0
      %v726 = vadd.f32 0.0, %v725
      %v727 = vpop.f32.mrb[0].mxu0
      %728 = vmatprep.mubr.f32.mxu0 0.0
      %729 = vmatmul.mubr.f32.gmra.mrb[0].mxu0 %v629
      %v730 = vpop.f32.mrb[0].mxu0
      %v731 = vadd.f32 0.0, %v730
      %v732 = vpop.f32.mrb[0].mxu0
      %733 = vmatprep.mubr.f32.mxu0 0.0
      %734 = vmatmul.mubr.f32.gmra.mrb[0].mxu0 %v632
      %v735 = vpop.f32.mrb[0].mxu0
      %v736 = vadd.f32 0.0, %v735
      %v737 = vpop.f32.mrb[0].mxu0
      %738 = vmatprep.mubr.f32.mxu0 0.0
      %739 = vmatmul.mubr.f32.gmra.mrb[0].mxu0 %v635
      %v740 = vpop.f32.mrb[0].mxu0
      %v741 = vadd.f32 0.0, %v740
      %v742 = vpop.f32.mrb[0].mxu0
      %743 = vmatprep.mubr.f32.mxu0 0.0
      %744 = vmatmul.mubr.f32.gmra.mrb[0].mxu0 %v638
      %v745 = vpop.f32.mrb[0].mxu0
      %v746 = vadd.f32 0.0, %v745
      %v747 = vpop.f32.mrb[0].mxu0
      %748 = vmatprep.mubr.f32.mxu0 0.0
      %749 = vmatmul.mubr.f32.gmra.mrb[0].mxu0 %v641
      %v750 = vpop.f32.mrb[0].mxu0
      %v751 = vadd.f32 0.0, %v750
      %v752 = vpop.f32.mrb[0].mxu0
      %753 = vmatprep.mubr.f32.mxu0 0.0
      %754 = vmatmul.mubr.f32.gmra.mrb[0].mxu0 %v644
      %v755 = vpop.f32.mrb[0].mxu0
      %v756 = vadd.f32 0.0, %v755
      %v757 = vpop.f32.mrb[0].mxu0
      %758 = vmatprep.mubr.f32.mxu0 0.0
      %759 = vmatmul.mubr.f32.gmra.mrb[0].mxu0 %v647
      %v760 = vpop.f32.mrb[0].mxu0
      %v761 = vadd.f32 0.0, %v760
      %v762 = vpop.f32.mrb[0].mxu0
      %763 = vdwg.mxu0
      %v764 = vmul.f32 %v716, %v716
      %v765 = vmul.f32 %v721, %v721
      %v766 = vmul.f32 %v726, %v726
      %v767 = vmul.f32 %v731, %v731
      %v768 = vmul.f32 %v716, %v726
      %v769 = vmul.f32 %v721, %v731
      %v770 = vsub.f32 %v736, %v764
      %v771 = vsub.f32 %v741, %v765
      %v772 = vsub.f32 %v746, %v766
      %v773 = vsub.f32 %v751, %v767
      %v774 = vsub.f32 %v756, %v768
      %v775 = vsub.f32 %v761, %v769
      %v776 = vmul.f32 %v768, 2.0
      %v777 = vmul.f32 %v769, 2.0
      %v778 = vadd.f32 %v776, 0.0001
      %v779 = vadd.f32 %v777, 0.0001
      %v780 = vmul.f32 %v774, 2.0
      %v781 = vmul.f32 %v775, 2.0
      %v782 = vadd.f32 %v780, 0.0009
      %v783 = vadd.f32 %v781, 0.0009
      %v784 = vmul.f32 %v778, %v782
      %v785 = vmul.f32 %v779, %v783
      %v786 = vadd.f32 %v764, %v766
      %v787 = vadd.f32 %v765, %v767
      %v788 = vadd.f32 %v786, 0.0001
      %v789 = vadd.f32 %v787, 0.0001
      %v790 = vadd.f32 %v770, %v772
      %v791 = vadd.f32 %v771, %v773
      %v792 = vadd.f32 %v790, 0.0009
      %v793 = vadd.f32 %v791, 0.0009
      %v794 = vmul.f32 %v788, %v792
      %v795 = vmul.f32 %v789, %v793
      %v796 = vrcp.pop %v794
      %v797 = vrcp.pop %v795
      %v798 = vmul.f32 %v784, %v796
      %v799 = vmul.f32 %v785, %v797
      %v800 = vsub.f32 1.0, %v798
      %v801 = vsub.f32 1.0, %v799
      %v802 = vmax.f32 %v800, 0.0
      %v803 = vmax.f32 %v801, 0.0
      %v804 = vmin.f32 %v802, 1.0
      %v805 = vmin.f32 %v803, 1.0
      %v806 = vmul.f32 %v804, 0.5
      %v807 = vmul.f32 %v805, 0.5
      %v808 = vsel %vm618, %v806, 0.0
      %v809 = vsel %vm618, %v807, 0.0
      %v810 = vadd.f32 %v808, %v809
      %811 = vadd.xlane.f32.xlu0 %v810
      %v812 = vpop.xlane.xlu0 %811
      %v813 = vrot.slane %v812, 4
      %v814 = vadd.f32 %v812, %v813
      %v815 = vrot.slane %v814, 2
      %v816 = vadd.f32 %v814, %v815
      %v817 = vrot.slane %v816, 1
      %v818 = vadd.f32 %v816, %v817
      %s819 = vtos %v818
      %v820 = vstv %s819
      %821 = vst [vmem:[%s215] sm:$0xff] %v820
      %p822 = scmp.lt.s32.totalorder %s15, 1
      %s823 = scalar_select %p822, %s15, 1
      %s824 = smul.addr %s823, 8
      %s825 = scalar_lea.vmem %s4, %s824
      // Predicated region
      $region37: #{ssim_loss.1} parent=35 // pred_check
        %p826 = pneg %p127
      $region38: #{ssim_loss.1} parent=35 // pred_check_branch
        %828 = sbr.rel (%p826) target = $region40
      $region39: #{ssim_loss.1} parent=35 // pred_region
        _
      $region40: #{ssim_loss.1} parent=35 // pred_fallthru
        _
    $region36: #{ssim_loss.1} parent=5 // pred_fallthru
      _
    %p829 = scmp.le.s32.totalorder 2, %s10
    // Predicated region
    $region41: #{ssim_loss.1} parent=5 // pred_check
      %p830 = pneg %p829
    $region42: #{ssim_loss.1} parent=5 // pred_check_branch
      %832 = sbr.rel (%p830) target = $region44
    $region43: #{ssim_loss.1} parent=5 // pred_region
      %s833 = ssub.s32 %s10, 2
      // Predicated region
      $region45: #{ssim_loss.1} parent=43 // pred_check
        %p834 = pneg %p133
      $region46: #{ssim_loss.1} parent=43 // pred_check_branch
        %836 = sbr.rel (%p834) target = $region48
      $region47: #{ssim_loss.1} parent=43 // pred_region
        %p837 = scmp.lt.s32.totalorder %s16, 1
        %s838 = scalar_select %p837, %s16, 1
        %s839 = smul.addr %s838, 8
        %s840 = scalar_lea.vmem %s4, %s839
      $region48: #{ssim_loss.1} parent=43 // pred_fallthru
        _
    $region44: #{ssim_loss.1} parent=5 // pred_fallthru
      _
  $region6: #{ssim_loss.1} parent=0 // loop_footer
    %s14 = sadd.s32 1, %s10
  $region7: #{ssim_loss.1} parent=0 // loop_footer_branch
    %9 = sbr.rel target = $region3
  $region8: #{ssim_loss.1} parent=0 // loop_exit
    _

</llo_original>
